<compile_context>
chip_gen: v7x
topology: tpu7x:2x2x1
jax: 0.10.0
libtpu: 0.0.40
codegen_flags: <defaults>
</compile_context>

<pallas_src>
import jax
import jax.numpy as jnp
from jax import lax
from jax.experimental import pallas as pl
from jax.experimental.pallas import tpu as pltpu

# Problem sizes (small, consistent with the module)
L = 8            # sequence length
IN = 16          # input_size
OUT = 8          # output_size
H = 32           # memory_vector_dim (= LSTM hidden size); 4H = 128 lanes
M = 32           # memory_size (must equal H for output_layer(memory_vector) to type-check)

LANES = 4 * H    # 128

# Row layout of the packed parameter slab (sublane axis), lane width = 128.
ROW_A = 0                  # A   = w_in @ w_ih[:H, :]        (IN, 128)
ROW_B = IN                 # B   = w_ih[H:, :]               (IN, 128)
ROW_HH = 2 * IN            # Whh                              (H, 128)
ROW_TL = 2 * IN + H        # W_tail (w_mem | w_mem @ w_out)   (H, 128)
ROW_BG = 2 * IN + 2 * H    # fused gate bias                  (1, 128)
ROW_BT = ROW_BG + 1        # fused tail bias                  (1, 128)
SLAB_ROWS = 104            # 98 used, padded up to a multiple of 8


def memnet_kernel(x_ref, m_ref, p_ref, o_ref):
    # Static views into the single packed parameter slab (free).
    A = p_ref[ROW_A:ROW_A + IN, :]          # (IN, 4H)
    B = p_ref[ROW_B:ROW_B + IN, :]          # (IN, 4H)
    Whh = p_ref[ROW_HH:ROW_HH + H, :]       # (H, 4H)
    Wtl = p_ref[ROW_TL:ROW_TL + H, :]       # (H, 128)
    b_g = p_ref[ROW_BG:ROW_BG + 1, :]       # (1, 4H)
    b_t = p_ref[ROW_BT:ROW_BT + 1, :]       # (1, 128)

    # Precompute input contribution to all LSTM gates for every timestep.
    # (input_layer + concat already folded into A / B / b_g on the host.)
    gx = (jnp.dot(x_ref[...], A, preferred_element_type=jnp.float32)
          + jnp.dot(m_ref[...], B, preferred_element_type=jnp.float32)
          + b_g)                            # (L, 4H) — exactly one vreg

    # LSTM recurrence, fully unrolled; state stays in vregs (no VMEM round trips).
    h = jnp.zeros((1, H), jnp.float32)
    c = jnp.zeros((1, H), jnp.float32)
    hs = []
    for t in range(L):
        gates = gx[t:t + 1, :] + jnp.dot(h, Whh,
                                         preferred_element_type=jnp.float32)  # (1, 4H)
        sg = jax.nn.sigmoid(gates)          # full-vreg EUP push
        th = jnp.tanh(gates)                # full-vreg EUP push
        i = sg[:, 0 * H:1 * H]
        f = sg[:, 1 * H:2 * H]
        g = th[:, 2 * H:3 * H]
        o = sg[:, 3 * H:4 * H]
        c = f * c + i * g
        h = o * jnp.tanh(c)
        hs.append(h)
    h_all = jnp.concatenate(hs, axis=0)     # (L, H), still a value

    # Single fused tail matmul producing both outputs in one lane-dense store:
    #   lanes [0:M)     -> memory_vector
    #   lanes [M:M+OUT) -> output
    o_ref[...] = jnp.dot(h_all, Wtl, preferred_element_type=jnp.float32) + b_t


def memory_network_forward(inputs, memory, param_slab):
    vspec = pl.BlockSpec(memory_space=pltpu.MemorySpace.VMEM)
    fn = pl.pallas_call(
        memnet_kernel,
        out_shape=jax.ShapeDtypeStruct((L, LANES), jnp.float32),
        in_specs=[vspec, vspec, vspec],
        out_specs=vspec,
    )
    slab = fn(inputs, memory, param_slab)
    out = slab[:, M:M + OUT]
    memvec = slab[:, :M]
    return out, memvec


def fold_params(params):
    """One-time host-side fold + pack of all module params into a single slab."""
    w_ih_top = params["w_ih"][:H, :]                       # rows multiplying input_transformed
    A = params["w_in"] @ w_ih_top                          # (IN, 4H)
    B = params["w_ih"][H:, :]                              # (IN, 4H)
    b_g = params["b_in"] @ w_ih_top + params["b_lstm"]     # (1, 4H)

    w_mo = params["w_mem"] @ params["w_out"]               # (H, OUT)
    b_mo = params["b_mem"] @ params["w_out"] + params["b_out"]  # (1, OUT)

    W_tail = jnp.zeros((H, LANES), jnp.float32)
    W_tail = W_tail.at[:, :M].set(params["w_mem"])
    W_tail = W_tail.at[:, M:M + OUT].set(w_mo)
    b_tail = jnp.zeros((1, LANES), jnp.float32)
    b_tail = b_tail.at[:, :M].set(params["b_mem"])
    b_tail = b_tail.at[:, M:M + OUT].set(b_mo)

    slab = jnp.zeros((SLAB_ROWS, LANES), jnp.float32)
    slab = slab.at[ROW_A:ROW_A + IN, :].set(A)
    slab = slab.at[ROW_B:ROW_B + IN, :].set(B)
    slab = slab.at[ROW_HH:ROW_HH + H, :].set(params["w_hh"])
    slab = slab.at[ROW_TL:ROW_TL + H, :].set(W_tail)
    slab = slab.at[ROW_BG, :].set(b_g[0])
    slab = slab.at[ROW_BT, :].set(b_tail[0])
    return slab


def reference_forward(inputs, memory, params):
    """Pure-JAX reference mirroring PyTorch semantics (gate order i,f,g,o)."""
    it = inputs @ params["w_in"] + params["b_in"][0]
    cat = jnp.concatenate([it, memory], axis=1)
    gx = cat @ params["w_ih"] + params["b_lstm"][0]

    def step(carry, gx_t):
        h, c = carry
        gates = gx_t + h @ params["w_hh"]
        i = jax.nn.sigmoid(gates[0 * H:1 * H])
        f = jax.nn.sigmoid(gates[1 * H:2 * H])
        g = jnp.tanh(gates[2 * H:3 * H])
        o = jax.nn.sigmoid(gates[3 * H:4 * H])
        c = f * c + i * g
        h = o * jnp.tanh(c)
        return (h, c), h

    (_, _), hs = lax.scan(step, (jnp.zeros(H), jnp.zeros(H)), gx)
    memvec = hs @ params["w_mem"] + params["b_mem"][0]
    out = memvec @ params["w_out"] + params["b_out"][0]
    return out, memvec


def init_params(key):
    ks = jax.random.split(key, 10)
    n = lambda k, s, sc=0.1: (sc * jax.random.normal(k, s)).astype(jnp.float32)
    return {
        # input_layer: Linear(IN, H)  (weights pre-transposed to (in, out))
        "w_in": n(ks[0], (IN, H)),
        "b_in": n(ks[1], (1, H)),
        # controller: LSTM(IN + H, H); weights pre-transposed to (in, 4H)
        "w_ih": n(ks[2], (IN + H, 4 * H)),
        "w_hh": n(ks[3], (H, 4 * H)),
        "b_lstm": n(ks[4], (1, 4 * H)) + n(ks[5], (1, 4 * H)),  # b_ih + b_hh
        # memory: Linear(H, M)
        "w_mem": n(ks[6], (H, M)),
        "b_mem": n(ks[7], (1, M)),
        # output_layer: Linear(M==H, OUT)
        "w_out": n(ks[8], (M, OUT)),
        "b_out": n(ks[9], (1, OUT)),
    }


if __name__ == "__main__":
    key = jax.random.PRNGKey(0)
    k_in, k_mem, k_par = jax.random.split(key, 3)

    inputs = jax.random.normal(k_in, (L, IN), jnp.float32)
    memory = jax.random.normal(k_mem, (L, IN), jnp.float32)
    params = init_params(k_par)

    # One-time host-side fold/pack (not a per-call cost).
    param_slab = jax.block_until_ready(fold_params(params))

    out, memvec = memory_network_forward(inputs, memory, param_slab)
    jax.block_until_ready((out, memvec))

    ref_out, ref_memvec = reference_forward(inputs, memory, params)
    assert out.shape == (L, OUT) and memvec.shape == (L, M)
    assert jnp.allclose(out, ref_out, rtol=1e-4, atol=1e-4)
    assert jnp.allclose(memvec, ref_memvec, rtol=1e-4, atol=1e-4)

    print("KERNEL_OK")
</pallas_src>

<mosaic_0001>
module attributes {stable_mosaic.version = 11 : i64} {
  func.func @memnet_kernel(%arg0: memref<8x16xf32, #tpu.memory_space<vmem>>, %arg1: memref<8x16xf32, #tpu.memory_space<vmem>>, %arg2: memref<104x128xf32, #tpu.memory_space<vmem>>, %arg3: memref<8x128xf32, #tpu.memory_space<vmem>>) attributes {dimension_semantics = [], scalar_prefetch = 0 : i64, scratch_operands = 0 : i64, tpu.core_type = #tpu.core_type<tc>} {
    %c0 = arith.constant 0 : index
    %c0_0 = arith.constant 0 : index
    %0 = vector.load %arg2[%c0, %c0_0] : memref<104x128xf32, #tpu.memory_space<vmem>>, vector<16x128xf32>
    %c16 = arith.constant 16 : index
    %c0_1 = arith.constant 0 : index
    %1 = vector.load %arg2[%c16, %c0_1] : memref<104x128xf32, #tpu.memory_space<vmem>>, vector<16x128xf32>
    %c32 = arith.constant 32 : index
    %c0_2 = arith.constant 0 : index
    %2 = vector.load %arg2[%c32, %c0_2] : memref<104x128xf32, #tpu.memory_space<vmem>>, vector<32x128xf32>
    %c64 = arith.constant 64 : index
    %c0_3 = arith.constant 0 : index
    %3 = vector.load %arg2[%c64, %c0_3] : memref<104x128xf32, #tpu.memory_space<vmem>>, vector<32x128xf32>
    %c96 = arith.constant 96 : index
    %c0_4 = arith.constant 0 : index
    %4 = vector.load %arg2[%c96, %c0_4] : memref<104x128xf32, #tpu.memory_space<vmem>>, vector<1x128xf32>
    %c97 = arith.constant 97 : index
    %c0_5 = arith.constant 0 : index
    %5 = vector.load %arg2[%c97, %c0_5] : memref<104x128xf32, #tpu.memory_space<vmem>>, vector<1x128xf32>
    %c0_6 = arith.constant 0 : index
    %c0_7 = arith.constant 0 : index
    %6 = vector.load %arg0[%c0_6, %c0_7] : memref<8x16xf32, #tpu.memory_space<vmem>>, vector<8x16xf32>
    %cst = arith.constant dense<0.000000e+00> : vector<8x128xf32>
    %7 = tpu.matmul %6, %0, %cst {dimension_numbers = #tpu.dot_dimension_numbers<[1], [0], [0], [1], [0, 0, 1, 1], [], []>} : vector<8x16xf32>, vector<16x128xf32>, vector<8x128xf32> -> vector<8x128xf32>
    %c0_8 = arith.constant 0 : index
    %c0_9 = arith.constant 0 : index
    %8 = vector.load %arg1[%c0_8, %c0_9] : memref<8x16xf32, #tpu.memory_space<vmem>>, vector<8x16xf32>
    %cst_10 = arith.constant dense<0.000000e+00> : vector<8x128xf32>
    %9 = tpu.matmul %8, %1, %cst_10 {dimension_numbers = #tpu.dot_dimension_numbers<[1], [0], [0], [1], [0, 0, 1, 1], [], []>} : vector<8x16xf32>, vector<16x128xf32>, vector<8x128xf32> -> vector<8x128xf32>
    %10 = arith.addf %7, %9 : vector<8x128xf32>
    %11 = vector.broadcast %4 : vector<1x128xf32> to vector<8x128xf32>
    %12 = arith.addf %10, %11 : vector<8x128xf32>
    %cst_11 = arith.constant 0.000000e+00 : f32
    %13 = vector.broadcast %cst_11 : f32 to vector<1x32xf32>
    %cst_12 = arith.constant 0.000000e+00 : f32
    %14 = vector.broadcast %cst_12 : f32 to vector<1x32xf32>
    %15 = vector.extract_strided_slice %12 {offsets = [0, 0], sizes = [1, 128], strides = [1, 1]} : vector<8x128xf32> to vector<1x128xf32>
    %cst_13 = arith.constant dense<0.000000e+00> : vector<1x128xf32>
    %16 = tpu.matmul %13, %2, %cst_13 {dimension_numbers = #tpu.dot_dimension_numbers<[1], [0], [0], [1], [0, 0, 1, 1], [], []>} : vector<1x32xf32>, vector<32x128xf32>, vector<1x128xf32> -> vector<1x128xf32>
    %17 = arith.addf %15, %16 : vector<1x128xf32>
    %18 = arith.negf %17 : vector<1x128xf32>
    %19 = math.exp %18 : vector<1x128xf32>
    %cst_14 = arith.constant 1.000000e+00 : f32
    %20 = vector.broadcast %cst_14 : f32 to vector<1x128xf32>
    %21 = arith.addf %20, %19 : vector<1x128xf32>
    %22 = arith.divf %20, %21 : vector<1x128xf32>
    %23 = math.tanh %17 : vector<1x128xf32>
    %24 = vector.extract_strided_slice %22 {offsets = [0, 0], sizes = [1, 32], strides = [1, 1]} : vector<1x128xf32> to vector<1x32xf32>
    %25 = vector.extract_strided_slice %22 {offsets = [0, 32], sizes = [1, 32], strides = [1, 1]} : vector<1x128xf32> to vector<1x32xf32>
    %26 = vector.extract_strided_slice %23 {offsets = [0, 64], sizes = [1, 32], strides = [1, 1]} : vector<1x128xf32> to vector<1x32xf32>
    %27 = vector.extract_strided_slice %22 {offsets = [0, 96], sizes = [1, 32], strides = [1, 1]} : vector<1x128xf32> to vector<1x32xf32>
    %28 = arith.mulf %25, %14 : vector<1x32xf32>
    %29 = arith.mulf %24, %26 : vector<1x32xf32>
    %30 = arith.addf %28, %29 : vector<1x32xf32>
    %31 = math.tanh %30 : vector<1x32xf32>
    %32 = arith.mulf %27, %31 : vector<1x32xf32>
    %33 = vector.extract_strided_slice %12 {offsets = [1, 0], sizes = [1, 128], strides = [1, 1]} : vector<8x128xf32> to vector<1x128xf32>
    %cst_15 = arith.constant dense<0.000000e+00> : vector<1x128xf32>
    %34 = tpu.matmul %32, %2, %cst_15 {dimension_numbers = #tpu.dot_dimension_numbers<[1], [0], [0], [1], [0, 0, 1, 1], [], []>} : vector<1x32xf32>, vector<32x128xf32>, vector<1x128xf32> -> vector<1x128xf32>
    %35 = arith.addf %33, %34 : vector<1x128xf32>
    %36 = arith.negf %35 : vector<1x128xf32>
    %37 = math.exp %36 : vector<1x128xf32>
    %cst_16 = arith.constant 1.000000e+00 : f32
    %38 = vector.broadcast %cst_16 : f32 to vector<1x128xf32>
    %39 = arith.addf %38, %37 : vector<1x128xf32>
    %40 = arith.divf %38, %39 : vector<1x128xf32>
    %41 = math.tanh %35 : vector<1x128xf32>
    %42 = vector.extract_strided_slice %40 {offsets = [0, 0], sizes = [1, 32], strides = [1, 1]} : vector<1x128xf32> to vector<1x32xf32>
    %43 = vector.extract_strided_slice %40 {offsets = [0, 32], sizes = [1, 32], strides = [1, 1]} : vector<1x128xf32> to vector<1x32xf32>
    %44 = vector.extract_strided_slice %41 {offsets = [0, 64], sizes = [1, 32], strides = [1, 1]} : vector<1x128xf32> to vector<1x32xf32>
    %45 = vector.extract_strided_slice %40 {offsets = [0, 96], sizes = [1, 32], strides = [1, 1]} : vector<1x128xf32> to vector<1x32xf32>
    %46 = arith.mulf %43, %30 : vector<1x32xf32>
    %47 = arith.mulf %42, %44 : vector<1x32xf32>
    %48 = arith.addf %46, %47 : vector<1x32xf32>
    %49 = math.tanh %48 : vector<1x32xf32>
    %50 = arith.mulf %45, %49 : vector<1x32xf32>
    %51 = vector.extract_strided_slice %12 {offsets = [2, 0], sizes = [1, 128], strides = [1, 1]} : vector<8x128xf32> to vector<1x128xf32>
    %cst_17 = arith.constant dense<0.000000e+00> : vector<1x128xf32>
    %52 = tpu.matmul %50, %2, %cst_17 {dimension_numbers = #tpu.dot_dimension_numbers<[1], [0], [0], [1], [0, 0, 1, 1], [], []>} : vector<1x32xf32>, vector<32x128xf32>, vector<1x128xf32> -> vector<1x128xf32>
    %53 = arith.addf %51, %52 : vector<1x128xf32>
    %54 = arith.negf %53 : vector<1x128xf32>
    %55 = math.exp %54 : vector<1x128xf32>
    %cst_18 = arith.constant 1.000000e+00 : f32
    %56 = vector.broadcast %cst_18 : f32 to vector<1x128xf32>
    %57 = arith.addf %56, %55 : vector<1x128xf32>
    %58 = arith.divf %56, %57 : vector<1x128xf32>
    %59 = math.tanh %53 : vector<1x128xf32>
    %60 = vector.extract_strided_slice %58 {offsets = [0, 0], sizes = [1, 32], strides = [1, 1]} : vector<1x128xf32> to vector<1x32xf32>
    %61 = vector.extract_strided_slice %58 {offsets = [0, 32], sizes = [1, 32], strides = [1, 1]} : vector<1x128xf32> to vector<1x32xf32>
    %62 = vector.extract_strided_slice %59 {offsets = [0, 64], sizes = [1, 32], strides = [1, 1]} : vector<1x128xf32> to vector<1x32xf32>
    %63 = vector.extract_strided_slice %58 {offsets = [0, 96], sizes = [1, 32], strides = [1, 1]} : vector<1x128xf32> to vector<1x32xf32>
    %64 = arith.mulf %61, %48 : vector<1x32xf32>
    %65 = arith.mulf %60, %62 : vector<1x32xf32>
    %66 = arith.addf %64, %65 : vector<1x32xf32>
    %67 = math.tanh %66 : vector<1x32xf32>
    %68 = arith.mulf %63, %67 : vector<1x32xf32>
    %69 = vector.extract_strided_slice %12 {offsets = [3, 0], sizes = [1, 128], strides = [1, 1]} : vector<8x128xf32> to vector<1x128xf32>
    %cst_19 = arith.constant dense<0.000000e+00> : vector<1x128xf32>
    %70 = tpu.matmul %68, %2, %cst_19 {dimension_numbers = #tpu.dot_dimension_numbers<[1], [0], [0], [1], [0, 0, 1, 1], [], []>} : vector<1x32xf32>, vector<32x128xf32>, vector<1x128xf32> -> vector<1x128xf32>
    %71 = arith.addf %69, %70 : vector<1x128xf32>
    %72 = arith.negf %71 : vector<1x128xf32>
    %73 = math.exp %72 : vector<1x128xf32>
    %cst_20 = arith.constant 1.000000e+00 : f32
    %74 = vector.broadcast %cst_20 : f32 to vector<1x128xf32>
    %75 = arith.addf %74, %73 : vector<1x128xf32>
    %76 = arith.divf %74, %75 : vector<1x128xf32>
    %77 = math.tanh %71 : vector<1x128xf32>
    %78 = vector.extract_strided_slice %76 {offsets = [0, 0], sizes = [1, 32], strides = [1, 1]} : vector<1x128xf32> to vector<1x32xf32>
    %79 = vector.extract_strided_slice %76 {offsets = [0, 32], sizes = [1, 32], strides = [1, 1]} : vector<1x128xf32> to vector<1x32xf32>
    %80 = vector.extract_strided_slice %77 {offsets = [0, 64], sizes = [1, 32], strides = [1, 1]} : vector<1x128xf32> to vector<1x32xf32>
    %81 = vector.extract_strided_slice %76 {offsets = [0, 96], sizes = [1, 32], strides = [1, 1]} : vector<1x128xf32> to vector<1x32xf32>
    %82 = arith.mulf %79, %66 : vector<1x32xf32>
    %83 = arith.mulf %78, %80 : vector<1x32xf32>
    %84 = arith.addf %82, %83 : vector<1x32xf32>
    %85 = math.tanh %84 : vector<1x32xf32>
    %86 = arith.mulf %81, %85 : vector<1x32xf32>
    %87 = vector.extract_strided_slice %12 {offsets = [4, 0], sizes = [1, 128], strides = [1, 1]} : vector<8x128xf32> to vector<1x128xf32>
    %cst_21 = arith.constant dense<0.000000e+00> : vector<1x128xf32>
    %88 = tpu.matmul %86, %2, %cst_21 {dimension_numbers = #tpu.dot_dimension_numbers<[1], [0], [0], [1], [0, 0, 1, 1], [], []>} : vector<1x32xf32>, vector<32x128xf32>, vector<1x128xf32> -> vector<1x128xf32>
    %89 = arith.addf %87, %88 : vector<1x128xf32>
    %90 = arith.negf %89 : vector<1x128xf32>
    %91 = math.exp %90 : vector<1x128xf32>
    %cst_22 = arith.constant 1.000000e+00 : f32
    %92 = vector.broadcast %cst_22 : f32 to vector<1x128xf32>
    %93 = arith.addf %92, %91 : vector<1x128xf32>
    %94 = arith.divf %92, %93 : vector<1x128xf32>
    %95 = math.tanh %89 : vector<1x128xf32>
    %96 = vector.extract_strided_slice %94 {offsets = [0, 0], sizes = [1, 32], strides = [1, 1]} : vector<1x128xf32> to vector<1x32xf32>
    %97 = vector.extract_strided_slice %94 {offsets = [0, 32], sizes = [1, 32], strides = [1, 1]} : vector<1x128xf32> to vector<1x32xf32>
    %98 = vector.extract_strided_slice %95 {offsets = [0, 64], sizes = [1, 32], strides = [1, 1]} : vector<1x128xf32> to vector<1x32xf32>
    %99 = vector.extract_strided_slice %94 {offsets = [0, 96], sizes = [1, 32], strides = [1, 1]} : vector<1x128xf32> to vector<1x32xf32>
    %100 = arith.mulf %97, %84 : vector<1x32xf32>
    %101 = arith.mulf %96, %98 : vector<1x32xf32>
    %102 = arith.addf %100, %101 : vector<1x32xf32>
    %103 = math.tanh %102 : vector<1x32xf32>
    %104 = arith.mulf %99, %103 : vector<1x32xf32>
    %105 = vector.extract_strided_slice %12 {offsets = [5, 0], sizes = [1, 128], strides = [1, 1]} : vector<8x128xf32> to vector<1x128xf32>
    %cst_23 = arith.constant dense<0.000000e+00> : vector<1x128xf32>
    %106 = tpu.matmul %104, %2, %cst_23 {dimension_numbers = #tpu.dot_dimension_numbers<[1], [0], [0], [1], [0, 0, 1, 1], [], []>} : vector<1x32xf32>, vector<32x128xf32>, vector<1x128xf32> -> vector<1x128xf32>
    %107 = arith.addf %105, %106 : vector<1x128xf32>
    %108 = arith.negf %107 : vector<1x128xf32>
    %109 = math.exp %108 : vector<1x128xf32>
    %cst_24 = arith.constant 1.000000e+00 : f32
    %110 = vector.broadcast %cst_24 : f32 to vector<1x128xf32>
    %111 = arith.addf %110, %109 : vector<1x128xf32>
    %112 = arith.divf %110, %111 : vector<1x128xf32>
    %113 = math.tanh %107 : vector<1x128xf32>
    %114 = vector.extract_strided_slice %112 {offsets = [0, 0], sizes = [1, 32], strides = [1, 1]} : vector<1x128xf32> to vector<1x32xf32>
    %115 = vector.extract_strided_slice %112 {offsets = [0, 32], sizes = [1, 32], strides = [1, 1]} : vector<1x128xf32> to vector<1x32xf32>
    %116 = vector.extract_strided_slice %113 {offsets = [0, 64], sizes = [1, 32], strides = [1, 1]} : vector<1x128xf32> to vector<1x32xf32>
    %117 = vector.extract_strided_slice %112 {offsets = [0, 96], sizes = [1, 32], strides = [1, 1]} : vector<1x128xf32> to vector<1x32xf32>
    %118 = arith.mulf %115, %102 : vector<1x32xf32>
    %119 = arith.mulf %114, %116 : vector<1x32xf32>
    %120 = arith.addf %118, %119 : vector<1x32xf32>
    %121 = math.tanh %120 : vector<1x32xf32>
    %122 = arith.mulf %117, %121 : vector<1x32xf32>
    %123 = vector.extract_strided_slice %12 {offsets = [6, 0], sizes = [1, 128], strides = [1, 1]} : vector<8x128xf32> to vector<1x128xf32>
    %cst_25 = arith.constant dense<0.000000e+00> : vector<1x128xf32>
    %124 = tpu.matmul %122, %2, %cst_25 {dimension_numbers = #tpu.dot_dimension_numbers<[1], [0], [0], [1], [0, 0, 1, 1], [], []>} : vector<1x32xf32>, vector<32x128xf32>, vector<1x128xf32> -> vector<1x128xf32>
    %125 = arith.addf %123, %124 : vector<1x128xf32>
    %126 = arith.negf %125 : vector<1x128xf32>
    %127 = math.exp %126 : vector<1x128xf32>
    %cst_26 = arith.constant 1.000000e+00 : f32
    %128 = vector.broadcast %cst_26 : f32 to vector<1x128xf32>
    %129 = arith.addf %128, %127 : vector<1x128xf32>
    %130 = arith.divf %128, %129 : vector<1x128xf32>
    %131 = math.tanh %125 : vector<1x128xf32>
    %132 = vector.extract_strided_slice %130 {offsets = [0, 0], sizes = [1, 32], strides = [1, 1]} : vector<1x128xf32> to vector<1x32xf32>
    %133 = vector.extract_strided_slice %130 {offsets = [0, 32], sizes = [1, 32], strides = [1, 1]} : vector<1x128xf32> to vector<1x32xf32>
    %134 = vector.extract_strided_slice %131 {offsets = [0, 64], sizes = [1, 32], strides = [1, 1]} : vector<1x128xf32> to vector<1x32xf32>
    %135 = vector.extract_strided_slice %130 {offsets = [0, 96], sizes = [1, 32], strides = [1, 1]} : vector<1x128xf32> to vector<1x32xf32>
    %136 = arith.mulf %133, %120 : vector<1x32xf32>
    %137 = arith.mulf %132, %134 : vector<1x32xf32>
    %138 = arith.addf %136, %137 : vector<1x32xf32>
    %139 = math.tanh %138 : vector<1x32xf32>
    %140 = arith.mulf %135, %139 : vector<1x32xf32>
    %141 = vector.extract_strided_slice %12 {offsets = [7, 0], sizes = [1, 128], strides = [1, 1]} : vector<8x128xf32> to vector<1x128xf32>
    %cst_27 = arith.constant dense<0.000000e+00> : vector<1x128xf32>
    %142 = tpu.matmul %140, %2, %cst_27 {dimension_numbers = #tpu.dot_dimension_numbers<[1], [0], [0], [1], [0, 0, 1, 1], [], []>} : vector<1x32xf32>, vector<32x128xf32>, vector<1x128xf32> -> vector<1x128xf32>
    %143 = arith.addf %141, %142 : vector<1x128xf32>
    %144 = arith.negf %143 : vector<1x128xf32>
    %145 = math.exp %144 : vector<1x128xf32>
    %cst_28 = arith.constant 1.000000e+00 : f32
    %146 = vector.broadcast %cst_28 : f32 to vector<1x128xf32>
    %147 = arith.addf %146, %145 : vector<1x128xf32>
    %148 = arith.divf %146, %147 : vector<1x128xf32>
    %149 = math.tanh %143 : vector<1x128xf32>
    %150 = vector.extract_strided_slice %148 {offsets = [0, 0], sizes = [1, 32], strides = [1, 1]} : vector<1x128xf32> to vector<1x32xf32>
    %151 = vector.extract_strided_slice %148 {offsets = [0, 32], sizes = [1, 32], strides = [1, 1]} : vector<1x128xf32> to vector<1x32xf32>
    %152 = vector.extract_strided_slice %149 {offsets = [0, 64], sizes = [1, 32], strides = [1, 1]} : vector<1x128xf32> to vector<1x32xf32>
    %153 = vector.extract_strided_slice %148 {offsets = [0, 96], sizes = [1, 32], strides = [1, 1]} : vector<1x128xf32> to vector<1x32xf32>
    %154 = arith.mulf %151, %138 : vector<1x32xf32>
    %155 = arith.mulf %150, %152 : vector<1x32xf32>
    %156 = arith.addf %154, %155 : vector<1x32xf32>
    %157 = math.tanh %156 : vector<1x32xf32>
    %158 = arith.mulf %153, %157 : vector<1x32xf32>
    %159 = tpu.concatenate %32, %50, %68, %86, %104, %122, %140, %158 in 0 : vector<1x32xf32>, vector<1x32xf32>, vector<1x32xf32>, vector<1x32xf32>, vector<1x32xf32>, vector<1x32xf32>, vector<1x32xf32>, vector<1x32xf32> -> vector<8x32xf32>
    %cst_29 = arith.constant dense<0.000000e+00> : vector<8x128xf32>
    %160 = tpu.matmul %159, %3, %cst_29 {dimension_numbers = #tpu.dot_dimension_numbers<[1], [0], [0], [1], [0, 0, 1, 1], [], []>} : vector<8x32xf32>, vector<32x128xf32>, vector<8x128xf32> -> vector<8x128xf32>
    %161 = vector.broadcast %5 : vector<1x128xf32> to vector<8x128xf32>
    %162 = arith.addf %160, %161 : vector<8x128xf32>
    %c0_30 = arith.constant 0 : index
    %c0_31 = arith.constant 0 : index
    %163 = vector.load %arg3[%c0_30, %c0_31] : memref<8x128xf32, #tpu.memory_space<vmem>>, vector<8x128xf32>
    tpu.vector_store %arg3[%c0_30, %c0_31], %162 {strides = array<i32>} : memref<8x128xf32, #tpu.memory_space<vmem>>, vector<8x128xf32>,
    return
  }
}

</mosaic_0001>

<llo_original>
// kernel: tpu_custom_call.1
$region0: #{tpu_custom_call.1}
  #allocation0 [shape = 'u32[]', space=smem, size = 0x4, offset = 0x4, fixed_abs, tag = 'smem constant byte address 0x4 - core index']
  #allocation1 [shape = 'u32[144,128]{1,0:T(1,128)}', space=vmem, size = 0x12000, scoped, tag = 'internal scratch']
  %s0 = inlined_call_operand.hbm [shape: f32[8,16], index: 0, kind: input, shape index: {}]
  %s1 = inlined_call_operand.hbm [shape: f32[8,16], index: 1, kind: input, shape index: {}]
  %s2 = inlined_call_operand.hbm [shape: f32[104,128], index: 2, kind: input, shape index: {}]
  %s3 = inlined_call_operand.hbm [shape: f32[8,128], index: 3, kind: output, shape index: {}]
  %s4 = sld [smem:[#allocation0]]
  $region34: #{tpu_custom_call.1} parent=0
    _
  %s6 = ssub.s32 1, %s4
  %s7 = scalar_select 0, %s6, %s4
  $region1: #{tpu_custom_call.1} parent=0
    #allocation2 [shape = 'u8[4096]{0}', space=vmem, size = 0x1000, scoped, tag = 'input window, operand 0, single buffered']
    #allocation3 [shape = 's32[1]{0}', space=sflag, size = 0x4, scoped, tag = 'scoped memory for tpu_custom_call.1']
    #allocation4 [shape = 's32[1]{0}', space=sflag, size = 0x4, scoped, tag = 'scoped memory for tpu_custom_call.1']
    #allocation5 [shape = 'u8[4096]{0}', space=vmem, size = 0x1000, scoped, tag = 'input window, operand 1, single buffered']
    #allocation6 [shape = 's32[1]{0}', space=sflag, size = 0x4, scoped, tag = 'scoped memory for tpu_custom_call.1']
    #allocation7 [shape = 'u8[53248]{0}', space=vmem, size = 0xd000, scoped, tag = 'input window, operand 2, single buffered']
    #allocation8 [shape = 'u8[4096]{0}', space=vmem, size = 0x1000, scoped, tag = 'output window, operand 0, single buffered']
    %8 = vsyncpa [#allocation3], 0
    %9 = vsyncpa [#allocation6], 0
    %10 = vsyncpa [#allocation4], 0
    // Predicated region
    $region2: #{tpu_custom_call.1} parent=1 // pred_check
      _
    $region3: #{tpu_custom_call.1} parent=1 // pred_check_branch
      %12 = sbr.rel (0) target = $region5
    $region4: #{tpu_custom_call.1} parent=1 // pred_region
      %s14 = ssub.s32 128, 128
      %15 = vsyncadd [#allocation3], %s14
      %s17 = sshll.u32 [#allocation2], 4
      %s18 = int_to_ptr.vmem [resolvable:$true] %s17
      %20 = dma.hbm_to_vmem [thread:$0]  %s0, 128, %s18, [#allocation3]
    $region5: #{tpu_custom_call.1} parent=1 // pred_fallthru
      _
    // Predicated region
    $region6: #{tpu_custom_call.1} parent=1 // pred_check
      _
    $region7: #{tpu_custom_call.1} parent=1 // pred_check_branch
      %22 = sbr.rel (0) target = $region9
    $region8: #{tpu_custom_call.1} parent=1 // pred_region
      %s24 = ssub.s32 128, 128
      %25 = vsyncadd [#allocation6], %s24
      %s27 = sshll.u32 [#allocation5], 4
      %s28 = int_to_ptr.vmem [resolvable:$true] %s27
      %30 = dma.hbm_to_vmem [thread:$0]  %s1, 128, %s28, [#allocation6]
    $region9: #{tpu_custom_call.1} parent=1 // pred_fallthru
      _
    // Predicated region
    $region10: #{tpu_custom_call.1} parent=1 // pred_check
      _
    $region11: #{tpu_custom_call.1} parent=1 // pred_check_branch
      %32 = sbr.rel (0) target = $region13
    $region12: #{tpu_custom_call.1} parent=1 // pred_region
      %s34 = ssub.s32 1664, 1664
      %35 = vsyncadd [#allocation6], %s34
      %s36 = sshll.u32 [#allocation7], 4
      %s37 = int_to_ptr.vmem [resolvable:$true] %s36
      %42 = dma.hbm_to_vmem [thread:$0]  %s2, 1664, %s37, [#allocation6], 128, 128, 8
    $region13: #{tpu_custom_call.1} parent=1 // pred_fallthru
      _
    // Predicated region
    $region14: #{tpu_custom_call.1} parent=1 // pred_check
      _
    $region15: #{tpu_custom_call.1} parent=1 // pred_check_branch
      %44 = sbr.rel (0) target = $region17
    $region16: #{tpu_custom_call.1} parent=1 // pred_region
      %45 = dma.done [#allocation3], 128
    $region17: #{tpu_custom_call.1} parent=1 // pred_fallthru
      _
    // Predicated region
    $region18: #{tpu_custom_call.1} parent=1 // pred_check
      _
    $region19: #{tpu_custom_call.1} parent=1 // pred_check_branch
      %47 = sbr.rel (0) target = $region21
    $region20: #{tpu_custom_call.1} parent=1 // pred_region
      %48 = dma.done [#allocation6], 128
    $region21: #{tpu_custom_call.1} parent=1 // pred_fallthru
      _
    // Predicated region
    $region22: #{tpu_custom_call.1} parent=1 // pred_check
      _
    $region23: #{tpu_custom_call.1} parent=1 // pred_check_branch
      %50 = sbr.rel (0) target = $region25
    $region24: #{tpu_custom_call.1} parent=1 // pred_region
      %51 = dma.done [#allocation6], 1664
    $region25: #{tpu_custom_call.1} parent=1 // pred_fallthru
      _
    %v52 = vld [vmem:[#allocation7] sm:$0xff]
    %v53 = vld [vmem:[#allocation7 + $0x8] sm:$0xff]
    %v54 = vld [vmem:[#allocation7 + $0x10] sm:$0xff]
    %v55 = vld [vmem:[#allocation7 + $0x18] sm:$0xff]
    %v56 = vld [vmem:[#allocation7 + $0x20] sm:$0xff]
    %v57 = vld [vmem:[#allocation7 + $0x28] sm:$0xff]
    %v58 = vld [vmem:[#allocation7 + $0x30] sm:$0xff]
    %v59 = vld [vmem:[#allocation7 + $0x38] sm:$0xff]
    %v60 = vld [vmem:[#allocation7 + $0x40] sm:$0xff]
    %v61 = vld [vmem:[#allocation7 + $0x48] sm:$0xff]
    %v62 = vld [vmem:[#allocation7 + $0x50] sm:$0xff]
    %v63 = vld [vmem:[#allocation7 + $0x58] sm:$0xff]
    %v64 = vld [vmem:[#allocation7 + $0x60] sm:$0x1]
    %v65 = vld [vmem:[#allocation7 + $0x61] sm:$0x1]
    %v66 = vld [vmem:[#allocation2] sm:$0xff]
    %v67 = vld [vmem:[#allocation5] sm:$0xff]
    %vm68 = vcmask 130048
    %v70 = vsel %vm68, %v67, 0
    %72 = vmatprep.subr.mxu0 0.0
    %73 = vmatpush1.msra.mxu0 %v54
    %74 = vmatprep.subr.mxu0 0.0
    %75 = vmatpush1.msra.mxu0 %v55
    %76 = vmatprep.subr.mxu0 0.0
    %77 = vmatpush1.msra.mxu0 0.0
    %78 = vmatprep.subr.mxu0 0.0
    %79 = vmatpush1.msra.mxu0 0.0
    %80 = vmatprep.subr.mxu0 0.0
    %81 = vmatpush1.msra.mxu0 0.0
    %82 = vmatprep.subr.mxu0 0.0
    %83 = vmatpush1.msra.mxu0 0.0
    %84 = vmatprep.subr.mxu0 0.0
    %85 = vmatpush1.msra.mxu0 0.0
    %86 = vmatprep.subr.mxu0 0.0
    %87 = vmatpush1.msra.mxu0 0.0
    %88 = vmatprep.subr.mxu0 0.0
    %89 = vmatpush1.msra.mxu0 0.0
    %90 = vmatprep.subr.mxu0 0.0
    %91 = vmatpush1.msra.mxu0 0.0
    %92 = vmatprep.subr.mxu0 0.0
    %93 = vmatpush1.msra.mxu0 0.0
    %94 = vmatprep.subr.mxu0 0.0
    %95 = vmatpush1.msra.mxu0 0.0
    %96 = vmatprep.subr.mxu0 0.0
    %97 = vmatpush1.msra.mxu0 0.0
    %98 = vmatprep.subr.mxu0 0.0
    %99 = vmatpush1.msra.mxu0 0.0
    %100 = vmatprep.subr.mxu0 0.0
    %101 = vmatpush1.msra.mxu0 0.0
    %102 = vmatprep.subr.mxu0 0.0
    %103 = vmatpush1.msra.mxu0 0.0
    %104 = vmatprep.subr.mxu0 0.0
    %105 = vmatpush1.msra.mxu0 0.0
    %106 = vmatprep.subr.mxu0 0.0
    %107 = vmatpush1.msra.mxu0 0.0
    %108 = vmatprep.subr.mxu0 0.0
    %109 = vmatpush1.msra.mxu0 0.0
    %110 = vmatprep.subr.mxu0 0.0
    %111 = vmatpush1.msra.mxu0 0.0
    %112 = vmatprep.subr.mxu0 0.0
    %113 = vmatpush1.msra.mxu0 0.0
    %114 = vmatprep.subr.mxu0 0.0
    %115 = vmatpush1.msra.mxu0 0.0
    %116 = vmatprep.subr.mxu0 0.0
    %117 = vmatpush1.msra.mxu0 0.0
    %118 = vmatprep.subr.mxu0 0.0
    %119 = vmatpush1.msra.mxu0 0.0
    %120 = vmatprep.subr.mxu0 0.0
    %121 = vmatpush1.msra.mxu0 0.0
    %122 = vmatprep.subr.mxu0 0.0
    %123 = vmatpush1.msra.mxu0 0.0
    %124 = vmatprep.subr.mxu0 0.0
    %125 = vmatpush1.msra.mxu0 0.0
    %126 = vmatprep.subr.mxu0 0.0
    %127 = vmatpush1.msra.mxu0 0.0
    %128 = vmatprep.subr.mxu0 0.0
    %129 = vmatpush1.msra.mxu0 0.0
    %130 = vmatprep.subr.mxu0 0.0
    %131 = vmatpush1.msra.mxu0 0.0
    %132 = vmatprep.subr.mxu0 0.0
    %133 = vmatpush1.msra.mxu0 0.0
    %134 = vmatprep.subr.mxu0 0.0
    %135 = vmatpush1.msra.mxu0 0.0
    %136 = vmatprep.mubr.f32.mxu0 0.0
    %137 = vmatmul.mubr.f32.gmra.mrb[0].mxu0 %v70
    %v138 = vpop.f32.mrb[0].mxu0
    %v139 = vadd.f32 0.0, %v138
    %v140 = vpop.f32.mrb[0].mxu0
    %141 = vdwg.mxu0
    %v143 = vsel %vm68, %v66, 0
    %145 = vmatprep.subr.mxu0 0.0
    %146 = vmatpush1.msra.mxu0 %v52
    %147 = vmatprep.subr.mxu0 0.0
    %148 = vmatpush1.msra.mxu0 %v53
    %149 = vmatprep.subr.mxu0 0.0
    %150 = vmatpush1.msra.mxu0 0.0
    %151 = vmatprep.subr.mxu0 0.0
    %152 = vmatpush1.msra.mxu0 0.0
    %153 = vmatprep.subr.mxu0 0.0
    %154 = vmatpush1.msra.mxu0 0.0
    %155 = vmatprep.subr.mxu0 0.0
    %156 = vmatpush1.msra.mxu0 0.0
    %157 = vmatprep.subr.mxu0 0.0
    %158 = vmatpush1.msra.mxu0 0.0
    %159 = vmatprep.subr.mxu0 0.0
    %160 = vmatpush1.msra.mxu0 0.0
    %161 = vmatprep.subr.mxu0 0.0
    %162 = vmatpush1.msra.mxu0 0.0
    %163 = vmatprep.subr.mxu0 0.0
    %164 = vmatpush1.msra.mxu0 0.0
    %165 = vmatprep.subr.mxu0 0.0
    %166 = vmatpush1.msra.mxu0 0.0
    %167 = vmatprep.subr.mxu0 0.0
    %168 = vmatpush1.msra.mxu0 0.0
    %169 = vmatprep.subr.mxu0 0.0
    %170 = vmatpush1.msra.mxu0 0.0
    %171 = vmatprep.subr.mxu0 0.0
    %172 = vmatpush1.msra.mxu0 0.0
    %173 = vmatprep.subr.mxu0 0.0
    %174 = vmatpush1.msra.mxu0 0.0
    %175 = vmatprep.subr.mxu0 0.0
    %176 = vmatpush1.msra.mxu0 0.0
    %177 = vmatprep.subr.mxu0 0.0
    %178 = vmatpush1.msra.mxu0 0.0
    %179 = vmatprep.subr.mxu0 0.0
    %180 = vmatpush1.msra.mxu0 0.0
    %181 = vmatprep.subr.mxu0 0.0
    %182 = vmatpush1.msra.mxu0 0.0
    %183 = vmatprep.subr.mxu0 0.0
    %184 = vmatpush1.msra.mxu0 0.0
    %185 = vmatprep.subr.mxu0 0.0
    %186 = vmatpush1.msra.mxu0 0.0
    %187 = vmatprep.subr.mxu0 0.0
    %188 = vmatpush1.msra.mxu0 0.0
    %189 = vmatprep.subr.mxu0 0.0
    %190 = vmatpush1.msra.mxu0 0.0
    %191 = vmatprep.subr.mxu0 0.0
    %192 = vmatpush1.msra.mxu0 0.0
    %193 = vmatprep.subr.mxu0 0.0
    %194 = vmatpush1.msra.mxu0 0.0
    %195 = vmatprep.subr.mxu0 0.0
    %196 = vmatpush1.msra.mxu0 0.0
    %197 = vmatprep.subr.mxu0 0.0
    %198 = vmatpush1.msra.mxu0 0.0
    %199 = vmatprep.subr.mxu0 0.0
    %200 = vmatpush1.msra.mxu0 0.0
    %201 = vmatprep.subr.mxu0 0.0
    %202 = vmatpush1.msra.mxu0 0.0
    %203 = vmatprep.subr.mxu0 0.0
    %204 = vmatpush1.msra.mxu0 0.0
    %205 = vmatprep.subr.mxu0 0.0
    %206 = vmatpush1.msra.mxu0 0.0
    %207 = vmatprep.subr.mxu0 0.0
    %208 = vmatpush1.msra.mxu0 0.0
    %209 = vmatprep.mubr.f32.mxu0 0.0
    %210 = vmatmul.mubr.f32.gmra.mrb[0].mxu0 %v143
    %v211 = vpop.f32.mrb[0].mxu0
    %v212 = vadd.f32 %v139, %v211
    %v213 = vpop.f32.mrb[0].mxu0
    %214 = vdwg.mxu0
    %v215 = vlaneseq
    %v216 = vshrl.u32 %v215, 7
    %v217 = vsub.s32 0, %v216
    %v218 = vrot.slane %v64, %v217
    %v219 = vadd.f32 %v212, %v218
    %vm220 = vcmask 261120
    %v222 = vsel %vm220, 0.0, 0
    %224 = vmatprep.subr.mxu0 0.0
    %225 = vmatpush1.msra.mxu0 %v56
    %226 = vmatprep.subr.mxu0 0.0
    %227 = vmatpush1.msra.mxu0 %v57
    %228 = vmatprep.subr.mxu0 0.0
    %229 = vmatpush1.msra.mxu0 %v58
    %230 = vmatprep.subr.mxu0 0.0
    %231 = vmatpush1.msra.mxu0 %v59
    %232 = vmatprep.subr.mxu0 0.0
    %233 = vmatpush1.msra.mxu0 0.0
    %234 = vmatprep.subr.mxu0 0.0
    %235 = vmatpush1.msra.mxu0 0.0
    %236 = vmatprep.subr.mxu0 0.0
    %237 = vmatpush1.msra.mxu0 0.0
    %238 = vmatprep.subr.mxu0 0.0
    %239 = vmatpush1.msra.mxu0 0.0
    %240 = vmatprep.subr.mxu0 0.0
    %241 = vmatpush1.msra.mxu0 0.0
    %242 = vmatprep.subr.mxu0 0.0
    %243 = vmatpush1.msra.mxu0 0.0
    %244 = vmatprep.subr.mxu0 0.0
    %245 = vmatpush1.msra.mxu0 0.0
    %246 = vmatprep.subr.mxu0 0.0
    %247 = vmatpush1.msra.mxu0 0.0
    %248 = vmatprep.subr.mxu0 0.0
    %249 = vmatpush1.msra.mxu0 0.0
    %250 = vmatprep.subr.mxu0 0.0
    %251 = vmatpush1.msra.mxu0 0.0
    %252 = vmatprep.subr.mxu0 0.0
    %253 = vmatpush1.msra.mxu0 0.0
    %254 = vmatprep.subr.mxu0 0.0
    %255 = vmatpush1.msra.mxu0 0.0
    %256 = vmatprep.subr.mxu0 0.0
    %257 = vmatpush1.msra.mxu0 0.0
    %258 = vmatprep.subr.mxu0 0.0
    %259 = vmatpush1.msra.mxu0 0.0
    %260 = vmatprep.subr.mxu0 0.0
    %261 = vmatpush1.msra.mxu0 0.0
    %262 = vmatprep.subr.mxu0 0.0
    %263 = vmatpush1.msra.mxu0 0.0
    %264 = vmatprep.subr.mxu0 0.0
    %265 = vmatpush1.msra.mxu0 0.0
    %266 = vmatprep.subr.mxu0 0.0
    %267 = vmatpush1.msra.mxu0 0.0
    %268 = vmatprep.subr.mxu0 0.0
    %269 = vmatpush1.msra.mxu0 0.0
    %270 = vmatprep.subr.mxu0 0.0
    %271 = vmatpush1.msra.mxu0 0.0
    %272 = vmatprep.subr.mxu0 0.0
    %273 = vmatpush1.msra.mxu0 0.0
    %274 = vmatprep.subr.mxu0 0.0
    %275 = vmatpush1.msra.mxu0 0.0
    %276 = vmatprep.subr.mxu0 0.0
    %277 = vmatpush1.msra.mxu0 0.0
    %278 = vmatprep.subr.mxu0 0.0
    %279 = vmatpush1.msra.mxu0 0.0
    %280 = vmatprep.subr.mxu0 0.0
    %281 = vmatpush1.msra.mxu0 0.0
    %282 = vmatprep.subr.mxu0 0.0
    %283 = vmatpush1.msra.mxu0 0.0
    %284 = vmatprep.subr.mxu0 0.0
    %285 = vmatpush1.msra.mxu0 0.0
    %286 = vmatprep.subr.mxu0 0.0
    %287 = vmatpush1.msra.mxu0 0.0
    %288 = vmatprep.mubr.f32.mxu0 0.0
    %289 = vmatmul.mubr.f32.gmra.mrb[0].mxu0 %v222
    %v290 = vpop.f32.mrb[0].mxu0
    %v291 = vadd.f32 0.0, %v290
    %v292 = vpop.f32.mrb[0].mxu0
    %293 = vdwg.mxu0
    %v294 = vadd.f32 %v219, %v291
    %v295 = vxor.u32 %v294, 2147483648
    %v296 = vmul.f32 %v295, 1.442695
    %v297 = vpow.pop %v296
    %v298 = vadd.f32 %v297, 1.0
    %v299 = vrcp.pop %v298
    %v300 = vmul.f32 1.0, %v299
    %v301 = vtanh.pop %v294
    %v302 = vmul.f32 %v300, 0.0
    %304 = vrot.lane.b32.xlu0 %v301, 64
    %v305 = vpop.permute.xlu0 %304
    %v307 = vmul.f32 %v300, %v305
    %309 = vrot.lane.b32.xlu0 %v307, 32
    %v310 = vpop.permute.xlu0 %309
    %v312 = vadd.f32 %v302, %v310
    %v313 = vtanh.pop %v312
    %315 = vrot.lane.b32.xlu0 %v313, 64
    %v316 = vpop.permute.xlu0 %315
    %v318 = vmul.f32 %v300, %v316
    %320 = vrot.lane.b32.xlu0 %v318, 32
    %v321 = vpop.permute.xlu0 %320
    %v322 = vsel %vm220, %v321, 0
    %324 = vmatprep.subr.mxu0 0.0
    %325 = vmatpush1.msra.mxu0 %v56
    %326 = vmatprep.subr.mxu0 0.0
    %327 = vmatpush1.msra.mxu0 %v57
    %328 = vmatprep.subr.mxu0 0.0
    %329 = vmatpush1.msra.mxu0 %v58
    %330 = vmatprep.subr.mxu0 0.0
    %331 = vmatpush1.msra.mxu0 %v59
    %332 = vmatprep.subr.mxu0 0.0
    %333 = vmatpush1.msra.mxu0 0.0
    %334 = vmatprep.subr.mxu0 0.0
    %335 = vmatpush1.msra.mxu0 0.0
    %336 = vmatprep.subr.mxu0 0.0
    %337 = vmatpush1.msra.mxu0 0.0
    %338 = vmatprep.subr.mxu0 0.0
    %339 = vmatpush1.msra.mxu0 0.0
    %340 = vmatprep.subr.mxu0 0.0
    %341 = vmatpush1.msra.mxu0 0.0
    %342 = vmatprep.subr.mxu0 0.0
    %343 = vmatpush1.msra.mxu0 0.0
    %344 = vmatprep.subr.mxu0 0.0
    %345 = vmatpush1.msra.mxu0 0.0
    %346 = vmatprep.subr.mxu0 0.0
    %347 = vmatpush1.msra.mxu0 0.0
    %348 = vmatprep.subr.mxu0 0.0
    %349 = vmatpush1.msra.mxu0 0.0
    %350 = vmatprep.subr.mxu0 0.0
    %351 = vmatpush1.msra.mxu0 0.0
    %352 = vmatprep.subr.mxu0 0.0
    %353 = vmatpush1.msra.mxu0 0.0
    %354 = vmatprep.subr.mxu0 0.0
    %355 = vmatpush1.msra.mxu0 0.0
    %356 = vmatprep.subr.mxu0 0.0
    %357 = vmatpush1.msra.mxu0 0.0
    %358 = vmatprep.subr.mxu0 0.0
    %359 = vmatpush1.msra.mxu0 0.0
    %360 = vmatprep.subr.mxu0 0.0
    %361 = vmatpush1.msra.mxu0 0.0
    %362 = vmatprep.subr.mxu0 0.0
    %363 = vmatpush1.msra.mxu0 0.0
    %364 = vmatprep.subr.mxu0 0.0
    %365 = vmatpush1.msra.mxu0 0.0
    %366 = vmatprep.subr.mxu0 0.0
    %367 = vmatpush1.msra.mxu0 0.0
    %368 = vmatprep.subr.mxu0 0.0
    %369 = vmatpush1.msra.mxu0 0.0
    %370 = vmatprep.subr.mxu0 0.0
    %371 = vmatpush1.msra.mxu0 0.0
    %372 = vmatprep.subr.mxu0 0.0
    %373 = vmatpush1.msra.mxu0 0.0
    %374 = vmatprep.subr.mxu0 0.0
    %375 = vmatpush1.msra.mxu0 0.0
    %376 = vmatprep.subr.mxu0 0.0
    %377 = vmatpush1.msra.mxu0 0.0
    %378 = vmatprep.subr.mxu0 0.0
    %379 = vmatpush1.msra.mxu0 0.0
    %380 = vmatprep.subr.mxu0 0.0
    %381 = vmatpush1.msra.mxu0 0.0
    %382 = vmatprep.subr.mxu0 0.0
    %383 = vmatpush1.msra.mxu0 0.0
    %384 = vmatprep.subr.mxu0 0.0
    %385 = vmatpush1.msra.mxu0 0.0
    %386 = vmatprep.subr.mxu0 0.0
    %387 = vmatpush1.msra.mxu0 0.0
    %388 = vmatprep.mubr.f32.mxu0 0.0
    %389 = vmatmul.mubr.f32.gmra.mrb[0].mxu0 %v322
    %v390 = vpop.f32.mrb[0].mxu0
    %v391 = vadd.f32 0.0, %v390
    %v392 = vpop.f32.mrb[0].mxu0
    %393 = vdwg.mxu0
    %v395 = vrot.slane %v391, 7
    %v397 = vadd.f32 %v219, %v395
    %v398 = vxor.u32 %v397, 2147483648
    %v399 = vmul.f32 %v398, 1.442695
    %v400 = vpow.pop %v399
    %v401 = vadd.f32 %v400, 1.0
    %v402 = vrcp.pop %v401
    %v403 = vmul.f32 1.0, %v402
    %v404 = vtanh.pop %v397
    %v406 = vrot.slane %v312, 7
    %v408 = vmul.f32 %v403, %v406
    %410 = vrot.lane.b32.xlu0 %v404, 64
    %v411 = vpop.permute.xlu0 %410
    %v413 = vmul.f32 %v403, %v411
    %415 = vrot.lane.b32.xlu0 %v413, 32
    %v416 = vpop.permute.xlu0 %415
    %v418 = vadd.f32 %v408, %v416
    %v419 = vtanh.pop %v418
    %421 = vrot.lane.b32.xlu0 %v419, 64
    %v422 = vpop.permute.xlu0 %421
    %v424 = vmul.f32 %v403, %v422
    %v426 = vrot.slane %v424, 1
    %427 = vrot.lane.b32.xlu0 %v426, 32
    %v428 = vpop.permute.xlu0 %427
    %v429 = vsel %vm220, %v428, 0
    %431 = vmatprep.subr.mxu0 0.0
    %432 = vmatpush1.msra.mxu0 %v56
    %433 = vmatprep.subr.mxu0 0.0
    %434 = vmatpush1.msra.mxu0 %v57
    %435 = vmatprep.subr.mxu0 0.0
    %436 = vmatpush1.msra.mxu0 %v58
    %437 = vmatprep.subr.mxu0 0.0
    %438 = vmatpush1.msra.mxu0 %v59
    %439 = vmatprep.subr.mxu0 0.0
    %440 = vmatpush1.msra.mxu0 0.0
    %441 = vmatprep.subr.mxu0 0.0
    %442 = vmatpush1.msra.mxu0 0.0
    %443 = vmatprep.subr.mxu0 0.0
    %444 = vmatpush1.msra.mxu0 0.0
    %445 = vmatprep.subr.mxu0 0.0
    %446 = vmatpush1.msra.mxu0 0.0
    %447 = vmatprep.subr.mxu0 0.0
    %448 = vmatpush1.msra.mxu0 0.0
    %449 = vmatprep.subr.mxu0 0.0
    %450 = vmatpush1.msra.mxu0 0.0
    %451 = vmatprep.subr.mxu0 0.0
    %452 = vmatpush1.msra.mxu0 0.0
    %453 = vmatprep.subr.mxu0 0.0
    %454 = vmatpush1.msra.mxu0 0.0
    %455 = vmatprep.subr.mxu0 0.0
    %456 = vmatpush1.msra.mxu0 0.0
    %457 = vmatprep.subr.mxu0 0.0
    %458 = vmatpush1.msra.mxu0 0.0
    %459 = vmatprep.subr.mxu0 0.0
    %460 = vmatpush1.msra.mxu0 0.0
    %461 = vmatprep.subr.mxu0 0.0
    %462 = vmatpush1.msra.mxu0 0.0
    %463 = vmatprep.subr.mxu0 0.0
    %464 = vmatpush1.msra.mxu0 0.0
    %465 = vmatprep.subr.mxu0 0.0
    %466 = vmatpush1.msra.mxu0 0.0
    %467 = vmatprep.subr.mxu0 0.0
    %468 = vmatpush1.msra.mxu0 0.0
    %469 = vmatprep.subr.mxu0 0.0
    %470 = vmatpush1.msra.mxu0 0.0
    %471 = vmatprep.subr.mxu0 0.0
    %472 = vmatpush1.msra.mxu0 0.0
    %473 = vmatprep.subr.mxu0 0.0
    %474 = vmatpush1.msra.mxu0 0.0
    %475 = vmatprep.subr.mxu0 0.0
    %476 = vmatpush1.msra.mxu0 0.0
    %477 = vmatprep.subr.mxu0 0.0
    %478 = vmatpush1.msra.mxu0 0.0
    %479 = vmatprep.subr.mxu0 0.0
    %480 = vmatpush1.msra.mxu0 0.0
    %481 = vmatprep.subr.mxu0 0.0
    %482 = vmatpush1.msra.mxu0 0.0
    %483 = vmatprep.subr.mxu0 0.0
    %484 = vmatpush1.msra.mxu0 0.0
    %485 = vmatprep.subr.mxu0 0.0
    %486 = vmatpush1.msra.mxu0 0.0
    %487 = vmatprep.subr.mxu0 0.0
    %488 = vmatpush1.msra.mxu0 0.0
    %489 = vmatprep.subr.mxu0 0.0
    %490 = vmatpush1.msra.mxu0 0.0
    %491 = vmatprep.subr.mxu0 0.0
    %492 = vmatpush1.msra.mxu0 0.0
    %493 = vmatprep.subr.mxu0 0.0
    %494 = vmatpush1.msra.mxu0 0.0
    %495 = vmatprep.mubr.f32.mxu0 0.0
    %496 = vmatmul.mubr.f32.gmra.mrb[0].mxu0 %v429
    %v497 = vpop.f32.mrb[0].mxu0
    %v498 = vadd.f32 0.0, %v497
    %v499 = vpop.f32.mrb[0].mxu0
    %500 = vdwg.mxu0
    %v502 = vrot.slane %v498, 6
    %v504 = vadd.f32 %v219, %v502
    %v505 = vxor.u32 %v504, 2147483648
    %v506 = vmul.f32 %v505, 1.442695
    %v507 = vpow.pop %v506
    %v508 = vadd.f32 %v507, 1.0
    %v509 = vrcp.pop %v508
    %v510 = vmul.f32 1.0, %v509
    %v511 = vtanh.pop %v504
    %v513 = vrot.slane %v418, 7
    %v515 = vmul.f32 %v510, %v513
    %517 = vrot.lane.b32.xlu0 %v511, 64
    %v518 = vpop.permute.xlu0 %517
    %v520 = vmul.f32 %v510, %v518
    %522 = vrot.lane.b32.xlu0 %v520, 32
    %v523 = vpop.permute.xlu0 %522
    %v525 = vadd.f32 %v515, %v523
    %v526 = vtanh.pop %v525
    %528 = vrot.lane.b32.xlu0 %v526, 64
    %v529 = vpop.permute.xlu0 %528
    %v531 = vmul.f32 %v510, %v529
    %v533 = vrot.slane %v531, 2
    %534 = vrot.lane.b32.xlu0 %v533, 32
    %v535 = vpop.permute.xlu0 %534
    %v536 = vsel %vm220, %v535, 0
    %538 = vmatprep.subr.mxu0 0.0
    %539 = vmatpush1.msra.mxu0 %v56
    %540 = vmatprep.subr.mxu0 0.0
    %541 = vmatpush1.msra.mxu0 %v57
    %542 = vmatprep.subr.mxu0 0.0
    %543 = vmatpush1.msra.mxu0 %v58
    %544 = vmatprep.subr.mxu0 0.0
    %545 = vmatpush1.msra.mxu0 %v59
    %546 = vmatprep.subr.mxu0 0.0
    %547 = vmatpush1.msra.mxu0 0.0
    %548 = vmatprep.subr.mxu0 0.0
    %549 = vmatpush1.msra.mxu0 0.0
    %550 = vmatprep.subr.mxu0 0.0
    %551 = vmatpush1.msra.mxu0 0.0
    %552 = vmatprep.subr.mxu0 0.0
    %553 = vmatpush1.msra.mxu0 0.0
    %554 = vmatprep.subr.mxu0 0.0
    %555 = vmatpush1.msra.mxu0 0.0
    %556 = vmatprep.subr.mxu0 0.0
    %557 = vmatpush1.msra.mxu0 0.0
    %558 = vmatprep.subr.mxu0 0.0
    %559 = vmatpush1.msra.mxu0 0.0
    %560 = vmatprep.subr.mxu0 0.0
    %561 = vmatpush1.msra.mxu0 0.0
    %562 = vmatprep.subr.mxu0 0.0
    %563 = vmatpush1.msra.mxu0 0.0
    %564 = vmatprep.subr.mxu0 0.0
    %565 = vmatpush1.msra.mxu0 0.0
    %566 = vmatprep.subr.mxu0 0.0
    %567 = vmatpush1.msra.mxu0 0.0
    %568 = vmatprep.subr.mxu0 0.0
    %569 = vmatpush1.msra.mxu0 0.0
    %570 = vmatprep.subr.mxu0 0.0
    %571 = vmatpush1.msra.mxu0 0.0
    %572 = vmatprep.subr.mxu0 0.0
    %573 = vmatpush1.msra.mxu0 0.0
    %574 = vmatprep.subr.mxu0 0.0
    %575 = vmatpush1.msra.mxu0 0.0
    %576 = vmatprep.subr.mxu0 0.0
    %577 = vmatpush1.msra.mxu0 0.0
    %578 = vmatprep.subr.mxu0 0.0
    %579 = vmatpush1.msra.mxu0 0.0
    %580 = vmatprep.subr.mxu0 0.0
    %581 = vmatpush1.msra.mxu0 0.0
    %582 = vmatprep.subr.mxu0 0.0
    %583 = vmatpush1.msra.mxu0 0.0
    %584 = vmatprep.subr.mxu0 0.0
    %585 = vmatpush1.msra.mxu0 0.0
    %586 = vmatprep.subr.mxu0 0.0
    %587 = vmatpush1.msra.mxu0 0.0
    %588 = vmatprep.subr.mxu0 0.0
    %589 = vmatpush1.msra.mxu0 0.0
    %590 = vmatprep.subr.mxu0 0.0
    %591 = vmatpush1.msra.mxu0 0.0
    %592 = vmatprep.subr.mxu0 0.0
    %593 = vmatpush1.msra.mxu0 0.0
    %594 = vmatprep.subr.mxu0 0.0
    %595 = vmatpush1.msra.mxu0 0.0
    %596 = vmatprep.subr.mxu0 0.0
    %597 = vmatpush1.msra.mxu0 0.0
    %598 = vmatprep.subr.mxu0 0.0
    %599 = vmatpush1.msra.mxu0 0.0
    %600 = vmatprep.subr.mxu0 0.0
    %601 = vmatpush1.msra.mxu0 0.0
    %602 = vmatprep.mubr.f32.mxu0 0.0
    %603 = vmatmul.mubr.f32.gmra.mrb[0].mxu0 %v536
    %v604 = vpop.f32.mrb[0].mxu0
    %v605 = vadd.f32 0.0, %v604
    %v606 = vpop.f32.mrb[0].mxu0
    %607 = vdwg.mxu0
    %v609 = vrot.slane %v605, 5
    %v611 = vadd.f32 %v219, %v609
    %v612 = vxor.u32 %v611, 2147483648
    %v613 = vmul.f32 %v612, 1.442695
    %v614 = vpow.pop %v613
    %v615 = vadd.f32 %v614, 1.0
    %v616 = vrcp.pop %v615
    %v617 = vmul.f32 1.0, %v616
    %v618 = vtanh.pop %v611
    %v620 = vrot.slane %v525, 7
    %v622 = vmul.f32 %v617, %v620
    %624 = vrot.lane.b32.xlu0 %v618, 64
    %v625 = vpop.permute.xlu0 %624
    %v627 = vmul.f32 %v617, %v625
    %629 = vrot.lane.b32.xlu0 %v627, 32
    %v630 = vpop.permute.xlu0 %629
    %v632 = vadd.f32 %v622, %v630
    %v633 = vtanh.pop %v632
    %635 = vrot.lane.b32.xlu0 %v633, 64
    %v636 = vpop.permute.xlu0 %635
    %v638 = vmul.f32 %v617, %v636
    %v640 = vrot.slane %v638, 3
    %641 = vrot.lane.b32.xlu0 %v640, 32
    %v642 = vpop.permute.xlu0 %641
    %v643 = vsel %vm220, %v642, 0
    %645 = vmatprep.subr.mxu0 0.0
    %646 = vmatpush1.msra.mxu0 %v56
    %647 = vmatprep.subr.mxu0 0.0
    %648 = vmatpush1.msra.mxu0 %v57
    %649 = vmatprep.subr.mxu0 0.0
    %650 = vmatpush1.msra.mxu0 %v58
    %651 = vmatprep.subr.mxu0 0.0
    %652 = vmatpush1.msra.mxu0 %v59
    %653 = vmatprep.subr.mxu0 0.0
    %654 = vmatpush1.msra.mxu0 0.0
    %655 = vmatprep.subr.mxu0 0.0
    %656 = vmatpush1.msra.mxu0 0.0
    %657 = vmatprep.subr.mxu0 0.0
    %658 = vmatpush1.msra.mxu0 0.0
    %659 = vmatprep.subr.mxu0 0.0
    %660 = vmatpush1.msra.mxu0 0.0
    %661 = vmatprep.subr.mxu0 0.0
    %662 = vmatpush1.msra.mxu0 0.0
    %663 = vmatprep.subr.mxu0 0.0
    %664 = vmatpush1.msra.mxu0 0.0
    %665 = vmatprep.subr.mxu0 0.0
    %666 = vmatpush1.msra.mxu0 0.0
    %667 = vmatprep.subr.mxu0 0.0
    %668 = vmatpush1.msra.mxu0 0.0
    %669 = vmatprep.subr.mxu0 0.0
    %670 = vmatpush1.msra.mxu0 0.0
    %671 = vmatprep.subr.mxu0 0.0
    %672 = vmatpush1.msra.mxu0 0.0
    %673 = vmatprep.subr.mxu0 0.0
    %674 = vmatpush1.msra.mxu0 0.0
    %675 = vmatprep.subr.mxu0 0.0
    %676 = vmatpush1.msra.mxu0 0.0
    %677 = vmatprep.subr.mxu0 0.0
    %678 = vmatpush1.msra.mxu0 0.0
    %679 = vmatprep.subr.mxu0 0.0
    %680 = vmatpush1.msra.mxu0 0.0
    %681 = vmatprep.subr.mxu0 0.0
    %682 = vmatpush1.msra.mxu0 0.0
    %683 = vmatprep.subr.mxu0 0.0
    %684 = vmatpush1.msra.mxu0 0.0
    %685 = vmatprep.subr.mxu0 0.0
    %686 = vmatpush1.msra.mxu0 0.0
    %687 = vmatprep.subr.mxu0 0.0
    %688 = vmatpush1.msra.mxu0 0.0
    %689 = vmatprep.subr.mxu0 0.0
    %690 = vmatpush1.msra.mxu0 0.0
    %691 = vmatprep.subr.mxu0 0.0
    %692 = vmatpush1.msra.mxu0 0.0
    %693 = vmatprep.subr.mxu0 0.0
    %694 = vmatpush1.msra.mxu0 0.0
    %695 = vmatprep.subr.mxu0 0.0
    %696 = vmatpush1.msra.mxu0 0.0
    %697 = vmatprep.subr.mxu0 0.0
    %698 = vmatpush1.msra.mxu0 0.0
    %699 = vmatprep.subr.mxu0 0.0
    %700 = vmatpush1.msra.mxu0 0.0
    %701 = vmatprep.subr.mxu0 0.0
    %702 = vmatpush1.msra.mxu0 0.0
    %703 = vmatprep.subr.mxu0 0.0
    %704 = vmatpush1.msra.mxu0 0.0
    %705 = vmatprep.subr.mxu0 0.0
    %706 = vmatpush1.msra.mxu0 0.0
    %707 = vmatprep.subr.mxu0 0.0
    %708 = vmatpush1.msra.mxu0 0.0
    %709 = vmatprep.mubr.f32.mxu0 0.0
    %710 = vmatmul.mubr.f32.gmra.mrb[0].mxu0 %v643
    %v711 = vpop.f32.mrb[0].mxu0
    %v712 = vadd.f32 0.0, %v711
    %v713 = vpop.f32.mrb[0].mxu0
    %714 = vdwg.mxu0
    %v716 = vrot.slane %v712, 4
    %v718 = vadd.f32 %v219, %v716
    %v719 = vxor.u32 %v718, 2147483648
    %v720 = vmul.f32 %v719, 1.442695
    %v721 = vpow.pop %v720
    %v722 = vadd.f32 %v721, 1.0
    %v723 = vrcp.pop %v722
    %v724 = vmul.f32 1.0, %v723
    %v725 = vtanh.pop %v718
    %v727 = vrot.slane %v632, 7
    %v729 = vmul.f32 %v724, %v727
    %731 = vrot.lane.b32.xlu0 %v725, 64
    %v732 = vpop.permute.xlu0 %731
    %v734 = vmul.f32 %v724, %v732
    %736 = vrot.lane.b32.xlu0 %v734, 32
    %v737 = vpop.permute.xlu0 %736
    %v739 = vadd.f32 %v729, %v737
    %v740 = vtanh.pop %v739
    %742 = vrot.lane.b32.xlu0 %v740, 64
    %v743 = vpop.permute.xlu0 %742
    %v745 = vmul.f32 %v724, %v743
    %v747 = vrot.slane %v745, 4
    %748 = vrot.lane.b32.xlu0 %v747, 32
    %v749 = vpop.permute.xlu0 %748
    %v750 = vsel %vm220, %v749, 0
    %752 = vmatprep.subr.mxu0 0.0
    %753 = vmatpush1.msra.mxu0 %v56
    %754 = vmatprep.subr.mxu0 0.0
    %755 = vmatpush1.msra.mxu0 %v57
    %756 = vmatprep.subr.mxu0 0.0
    %757 = vmatpush1.msra.mxu0 %v58
    %758 = vmatprep.subr.mxu0 0.0
    %759 = vmatpush1.msra.mxu0 %v59
    %760 = vmatprep.subr.mxu0 0.0
    %761 = vmatpush1.msra.mxu0 0.0
    %762 = vmatprep.subr.mxu0 0.0
    %763 = vmatpush1.msra.mxu0 0.0
    %764 = vmatprep.subr.mxu0 0.0
    %765 = vmatpush1.msra.mxu0 0.0
    %766 = vmatprep.subr.mxu0 0.0
    %767 = vmatpush1.msra.mxu0 0.0
    %768 = vmatprep.subr.mxu0 0.0
    %769 = vmatpush1.msra.mxu0 0.0
    %770 = vmatprep.subr.mxu0 0.0
    %771 = vmatpush1.msra.mxu0 0.0
    %772 = vmatprep.subr.mxu0 0.0
    %773 = vmatpush1.msra.mxu0 0.0
    %774 = vmatprep.subr.mxu0 0.0
    %775 = vmatpush1.msra.mxu0 0.0
    %776 = vmatprep.subr.mxu0 0.0
    %777 = vmatpush1.msra.mxu0 0.0
    %778 = vmatprep.subr.mxu0 0.0
    %779 = vmatpush1.msra.mxu0 0.0
    %780 = vmatprep.subr.mxu0 0.0
    %781 = vmatpush1.msra.mxu0 0.0
    %782 = vmatprep.subr.mxu0 0.0
    %783 = vmatpush1.msra.mxu0 0.0
    %784 = vmatprep.subr.mxu0 0.0
    %785 = vmatpush1.msra.mxu0 0.0
    %786 = vmatprep.subr.mxu0 0.0
    %787 = vmatpush1.msra.mxu0 0.0
    %788 = vmatprep.subr.mxu0 0.0
    %789 = vmatpush1.msra.mxu0 0.0
    %790 = vmatprep.subr.mxu0 0.0
    %791 = vmatpush1.msra.mxu0 0.0
    %792 = vmatprep.subr.mxu0 0.0
    %793 = vmatpush1.msra.mxu0 0.0
    %794 = vmatprep.subr.mxu0 0.0
    %795 = vmatpush1.msra.mxu0 0.0
    %796 = vmatprep.subr.mxu0 0.0
    %797 = vmatpush1.msra.mxu0 0.0
    %798 = vmatprep.subr.mxu0 0.0
    %799 = vmatpush1.msra.mxu0 0.0
    %800 = vmatprep.subr.mxu0 0.0
    %801 = vmatpush1.msra.mxu0 0.0
    %802 = vmatprep.subr.mxu0 0.0
    %803 = vmatpush1.msra.mxu0 0.0
    %804 = vmatprep.subr.mxu0 0.0
    %805 = vmatpush1.msra.mxu0 0.0
    %806 = vmatprep.subr.mxu0 0.0
    %807 = vmatpush1.msra.mxu0 0.0
    %808 = vmatprep.subr.mxu0 0.0
    %809 = vmatpush1.msra.mxu0 0.0
    %810 = vmatprep.subr.mxu0 0.0
    %811 = vmatpush1.msra.mxu0 0.0
    %812 = vmatprep.subr.mxu0 0.0
    %813 = vmatpush1.msra.mxu0 0.0
    %814 = vmatprep.subr.mxu0 0.0
    %815 = vmatpush1.msra.mxu0 0.0
    %816 = vmatprep.mubr.f32.mxu0 0.0
    %817 = vmatmul.mubr.f32.gmra.mrb[0].mxu0 %v750
    %v818 = vpop.f32.mrb[0].mxu0
    %v819 = vadd.f32 0.0, %v818
    %v820 = vpop.f32.mrb[0].mxu0
    %821 = vdwg.mxu0
    %v823 = vrot.slane %v819, 3
    %v825 = vadd.f32 %v219, %v823
    %v826 = vxor.u32 %v825, 2147483648
    %v827 = vmul.f32 %v826, 1.442695
    %v828 = vpow.pop %v827
    %v829 = vadd.f32 %v828, 1.0
    %v830 = vrcp.pop %v829
    %v831 = vmul.f32 1.0, %v830
    %v832 = vtanh.pop %v825
    %v834 = vrot.slane %v739, 7
    %v836 = vmul.f32 %v831, %v834
    %838 = vrot.lane.b32.xlu0 %v832, 64
    %v839 = vpop.permute.xlu0 %838
    %v841 = vmul.f32 %v831, %v839
    %843 = vrot.lane.b32.xlu0 %v841, 32
    %v844 = vpop.permute.xlu0 %843
    %v846 = vadd.f32 %v836, %v844
    %v847 = vtanh.pop %v846
    %849 = vrot.lane.b32.xlu0 %v847, 64
    %v850 = vpop.permute.xlu0 %849
    %v852 = vmul.f32 %v831, %v850
    %v854 = vrot.slane %v852, 5
    %855 = vrot.lane.b32.xlu0 %v854, 32
    %v856 = vpop.permute.xlu0 %855
    %v857 = vsel %vm220, %v856, 0
    %859 = vmatprep.subr.mxu0 0.0
    %860 = vmatpush1.msra.mxu0 %v56
    %861 = vmatprep.subr.mxu0 0.0
    %862 = vmatpush1.msra.mxu0 %v57
    %863 = vmatprep.subr.mxu0 0.0
    %864 = vmatpush1.msra.mxu0 %v58
    %865 = vmatprep.subr.mxu0 0.0
    %866 = vmatpush1.msra.mxu0 %v59
    %867 = vmatprep.subr.mxu0 0.0
    %868 = vmatpush1.msra.mxu0 0.0
    %869 = vmatprep.subr.mxu0 0.0
    %870 = vmatpush1.msra.mxu0 0.0
    %871 = vmatprep.subr.mxu0 0.0
    %872 = vmatpush1.msra.mxu0 0.0
    %873 = vmatprep.subr.mxu0 0.0
    %874 = vmatpush1.msra.mxu0 0.0
    %875 = vmatprep.subr.mxu0 0.0
    %876 = vmatpush1.msra.mxu0 0.0
    %877 = vmatprep.subr.mxu0 0.0
    %878 = vmatpush1.msra.mxu0 0.0
    %879 = vmatprep.subr.mxu0 0.0
    %880 = vmatpush1.msra.mxu0 0.0
    %881 = vmatprep.subr.mxu0 0.0
    %882 = vmatpush1.msra.mxu0 0.0
    %883 = vmatprep.subr.mxu0 0.0
    %884 = vmatpush1.msra.mxu0 0.0
    %885 = vmatprep.subr.mxu0 0.0
    %886 = vmatpush1.msra.mxu0 0.0
    %887 = vmatprep.subr.mxu0 0.0
    %888 = vmatpush1.msra.mxu0 0.0
    %889 = vmatprep.subr.mxu0 0.0
    %890 = vmatpush1.msra.mxu0 0.0
    %891 = vmatprep.subr.mxu0 0.0
    %892 = vmatpush1.msra.mxu0 0.0
    %893 = vmatprep.subr.mxu0 0.0
    %894 = vmatpush1.msra.mxu0 0.0
    %895 = vmatprep.subr.mxu0 0.0
    %896 = vmatpush1.msra.mxu0 0.0
    %897 = vmatprep.subr.mxu0 0.0
    %898 = vmatpush1.msra.mxu0 0.0
    %899 = vmatprep.subr.mxu0 0.0
    %900 = vmatpush1.msra.mxu0 0.0
    %901 = vmatprep.subr.mxu0 0.0
    %902 = vmatpush1.msra.mxu0 0.0
    %903 = vmatprep.subr.mxu0 0.0
    %904 = vmatpush1.msra.mxu0 0.0
    %905 = vmatprep.subr.mxu0 0.0
    %906 = vmatpush1.msra.mxu0 0.0
    %907 = vmatprep.subr.mxu0 0.0
    %908 = vmatpush1.msra.mxu0 0.0
    %909 = vmatprep.subr.mxu0 0.0
    %910 = vmatpush1.msra.mxu0 0.0
    %911 = vmatprep.subr.mxu0 0.0
    %912 = vmatpush1.msra.mxu0 0.0
    %913 = vmatprep.subr.mxu0 0.0
    %914 = vmatpush1.msra.mxu0 0.0
    %915 = vmatprep.subr.mxu0 0.0
    %916 = vmatpush1.msra.mxu0 0.0
    %917 = vmatprep.subr.mxu0 0.0
    %918 = vmatpush1.msra.mxu0 0.0
    %919 = vmatprep.subr.mxu0 0.0
    %920 = vmatpush1.msra.mxu0 0.0
    %921 = vmatprep.subr.mxu0 0.0
    %922 = vmatpush1.msra.mxu0 0.0
    %923 = vmatprep.mubr.f32.mxu0 0.0
    %924 = vmatmul.mubr.f32.gmra.mrb[0].mxu0 %v857
    %v925 = vpop.f32.mrb[0].mxu0
    %v926 = vadd.f32 0.0, %v925
    %v927 = vpop.f32.mrb[0].mxu0
    %928 = vdwg.mxu0
    %v930 = vrot.slane %v926, 2
    %v932 = vadd.f32 %v219, %v930
    %v933 = vxor.u32 %v932, 2147483648
    %v934 = vmul.f32 %v933, 1.442695
    %v935 = vpow.pop %v934
    %v936 = vadd.f32 %v935, 1.0
    %v937 = vrcp.pop %v936
    %v938 = vmul.f32 1.0, %v937
    %v939 = vtanh.pop %v932
    %v941 = vrot.slane %v846, 7
    %v943 = vmul.f32 %v938, %v941
    %945 = vrot.lane.b32.xlu0 %v939, 64
    %v946 = vpop.permute.xlu0 %945
    %v948 = vmul.f32 %v938, %v946
    %950 = vrot.lane.b32.xlu0 %v948, 32
    %v951 = vpop.permute.xlu0 %950
    %v953 = vadd.f32 %v943, %v951
    %v954 = vtanh.pop %v953
    %956 = vrot.lane.b32.xlu0 %v954, 64
    %v957 = vpop.permute.xlu0 %956
    %v959 = vmul.f32 %v938, %v957
    %v961 = vrot.slane %v959, 6
    %962 = vrot.lane.b32.xlu0 %v961, 32
    %v963 = vpop.permute.xlu0 %962
    %v964 = vsel %vm220, %v963, 0
    %966 = vmatprep.subr.mxu0 0.0
    %967 = vmatpush1.msra.mxu0 %v56
    %968 = vmatprep.subr.mxu0 0.0
    %969 = vmatpush1.msra.mxu0 %v57
    %970 = vmatprep.subr.mxu0 0.0
    %971 = vmatpush1.msra.mxu0 %v58
    %972 = vmatprep.subr.mxu0 0.0
    %973 = vmatpush1.msra.mxu0 %v59
    %974 = vmatprep.subr.mxu0 0.0
    %975 = vmatpush1.msra.mxu0 0.0
    %976 = vmatprep.subr.mxu0 0.0
    %977 = vmatpush1.msra.mxu0 0.0
    %978 = vmatprep.subr.mxu0 0.0
    %979 = vmatpush1.msra.mxu0 0.0
    %980 = vmatprep.subr.mxu0 0.0
    %981 = vmatpush1.msra.mxu0 0.0
    %982 = vmatprep.subr.mxu0 0.0
    %983 = vmatpush1.msra.mxu0 0.0
    %984 = vmatprep.subr.mxu0 0.0
    %985 = vmatpush1.msra.mxu0 0.0
    %986 = vmatprep.subr.mxu0 0.0
    %987 = vmatpush1.msra.mxu0 0.0
    %988 = vmatprep.subr.mxu0 0.0
    %989 = vmatpush1.msra.mxu0 0.0
    %990 = vmatprep.subr.mxu0 0.0
    %991 = vmatpush1.msra.mxu0 0.0
    %992 = vmatprep.subr.mxu0 0.0
    %993 = vmatpush1.msra.mxu0 0.0
    %994 = vmatprep.subr.mxu0 0.0
    %995 = vmatpush1.msra.mxu0 0.0
    %996 = vmatprep.subr.mxu0 0.0
    %997 = vmatpush1.msra.mxu0 0.0
    %998 = vmatprep.subr.mxu0 0.0
    %999 = vmatpush1.msra.mxu0 0.0
    %1000 = vmatprep.subr.mxu0 0.0
    %1001 = vmatpush1.msra.mxu0 0.0
    %1002 = vmatprep.subr.mxu0 0.0
    %1003 = vmatpush1.msra.mxu0 0.0
    %1004 = vmatprep.subr.mxu0 0.0
    %1005 = vmatpush1.msra.mxu0 0.0
    %1006 = vmatprep.subr.mxu0 0.0
    %1007 = vmatpush1.msra.mxu0 0.0
    %1008 = vmatprep.subr.mxu0 0.0
    %1009 = vmatpush1.msra.mxu0 0.0
    %1010 = vmatprep.subr.mxu0 0.0
    %1011 = vmatpush1.msra.mxu0 0.0
    %1012 = vmatprep.subr.mxu0 0.0
    %1013 = vmatpush1.msra.mxu0 0.0
    %1014 = vmatprep.subr.mxu0 0.0
    %1015 = vmatpush1.msra.mxu0 0.0
    %1016 = vmatprep.subr.mxu0 0.0
    %1017 = vmatpush1.msra.mxu0 0.0
    %1018 = vmatprep.subr.mxu0 0.0
    %1019 = vmatpush1.msra.mxu0 0.0
    %1020 = vmatprep.subr.mxu0 0.0
    %1021 = vmatpush1.msra.mxu0 0.0
    %1022 = vmatprep.subr.mxu0 0.0
    %1023 = vmatpush1.msra.mxu0 0.0
    %1024 = vmatprep.subr.mxu0 0.0
    %1025 = vmatpush1.msra.mxu0 0.0
    %1026 = vmatprep.subr.mxu0 0.0
    %1027 = vmatpush1.msra.mxu0 0.0
    %1028 = vmatprep.subr.mxu0 0.0
    %1029 = vmatpush1.msra.mxu0 0.0
    %1030 = vmatprep.mubr.f32.mxu0 0.0
    %1031 = vmatmul.mubr.f32.gmra.mrb[0].mxu0 %v964
    %v1032 = vpop.f32.mrb[0].mxu0
    %v1033 = vadd.f32 0.0, %v1032
    %v1034 = vpop.f32.mrb[0].mxu0
    %1035 = vdwg.mxu0
    %v1037 = vrot.slane %v1033, 1
    %v1039 = vadd.f32 %v219, %v1037
    %v1040 = vxor.u32 %v1039, 2147483648
    %v1041 = vmul.f32 %v1040, 1.442695
    %v1042 = vpow.pop %v1041
    %v1043 = vadd.f32 %v1042, 1.0
    %v1044 = vrcp.pop %v1043
    %v1045 = vmul.f32 1.0, %v1044
    %v1046 = vtanh.pop %v1039
    %v1048 = vrot.slane %v953, 7
    %v1050 = vmul.f32 %v1045, %v1048
    %1052 = vrot.lane.b32.xlu0 %v1046, 64
    %v1053 = vpop.permute.xlu0 %1052
    %v1055 = vmul.f32 %v1045, %v1053
    %1057 = vrot.lane.b32.xlu0 %v1055, 32
    %v1058 = vpop.permute.xlu0 %1057
    %v1060 = vadd.f32 %v1050, %v1058
    %v1061 = vtanh.pop %v1060
    %1063 = vrot.lane.b32.xlu0 %v1061, 64
    %v1064 = vpop.permute.xlu0 %1063
    %v1066 = vmul.f32 %v1045, %v1064
    %vm1067 = vcmask 1040384
    %v1068 = vsel %vm1067, %v318, %v424
    %vm1069 = vcmask 1041408
    %v1070 = vsel %vm1069, %v1068, %v531
    %vm1071 = vcmask 1042432
    %v1072 = vsel %vm1071, %v1070, %v638
    %vm1073 = vcmask 1043456
    %v1074 = vsel %vm1073, %v1072, %v745
    %vm1075 = vcmask 1044480
    %v1076 = vsel %vm1075, %v1074, %v852
    %vm1077 = vcmask 1045504
    %v1078 = vsel %vm1077, %v1076, %v959
    %vm1079 = vcmask 1046528
    %v1080 = vsel %vm1079, %v1078, %v1066
    %v1081 = vlaneseq
    %v1082 = vshrl.u32 %v1081, 7
    %v1083 = vsub.s32 0, %v1082
    %v1084 = vrot.slane %v65, %v1083
    %1086 = vrot.lane.b32.xlu0 %v1080, 32
    %v1087 = vpop.permute.xlu0 %1086
    %v1088 = vsel %vm220, %v1087, 0
    %1090 = vmatprep.subr.mxu0 0.0
    %1091 = vmatpush1.msra.mxu0 %v60
    %1092 = vmatprep.subr.mxu0 0.0
    %1093 = vmatpush1.msra.mxu0 %v61
    %1094 = vmatprep.subr.mxu0 0.0
    %1095 = vmatpush1.msra.mxu0 %v62
    %1096 = vmatprep.subr.mxu0 0.0
    %1097 = vmatpush1.msra.mxu0 %v63
    %1098 = vmatprep.subr.mxu0 0.0
    %1099 = vmatpush1.msra.mxu0 0.0
    %1100 = vmatprep.subr.mxu0 0.0
    %1101 = vmatpush1.msra.mxu0 0.0
    %1102 = vmatprep.subr.mxu0 0.0
    %1103 = vmatpush1.msra.mxu0 0.0
    %1104 = vmatprep.subr.mxu0 0.0
    %1105 = vmatpush1.msra.mxu0 0.0
    %1106 = vmatprep.subr.mxu0 0.0
    %1107 = vmatpush1.msra.mxu0 0.0
    %1108 = vmatprep.subr.mxu0 0.0
    %1109 = vmatpush1.msra.mxu0 0.0
    %1110 = vmatprep.subr.mxu0 0.0
    %1111 = vmatpush1.msra.mxu0 0.0
    %1112 = vmatprep.subr.mxu0 0.0
    %1113 = vmatpush1.msra.mxu0 0.0
    %1114 = vmatprep.subr.mxu0 0.0
    %1115 = vmatpush1.msra.mxu0 0.0
    %1116 = vmatprep.subr.mxu0 0.0
    %1117 = vmatpush1.msra.mxu0 0.0
    %1118 = vmatprep.subr.mxu0 0.0
    %1119 = vmatpush1.msra.mxu0 0.0
    %1120 = vmatprep.subr.mxu0 0.0
    %1121 = vmatpush1.msra.mxu0 0.0
    %1122 = vmatprep.subr.mxu0 0.0
    %1123 = vmatpush1.msra.mxu0 0.0
    %1124 = vmatprep.subr.mxu0 0.0
    %1125 = vmatpush1.msra.mxu0 0.0
    %1126 = vmatprep.subr.mxu0 0.0
    %1127 = vmatpush1.msra.mxu0 0.0
    %1128 = vmatprep.subr.mxu0 0.0
    %1129 = vmatpush1.msra.mxu0 0.0
    %1130 = vmatprep.subr.mxu0 0.0
    %1131 = vmatpush1.msra.mxu0 0.0
    %1132 = vmatprep.subr.mxu0 0.0
    %1133 = vmatpush1.msra.mxu0 0.0
    %1134 = vmatprep.subr.mxu0 0.0
    %1135 = vmatpush1.msra.mxu0 0.0
    %1136 = vmatprep.subr.mxu0 0.0
    %1137 = vmatpush1.msra.mxu0 0.0
    %1138 = vmatprep.subr.mxu0 0.0
    %1139 = vmatpush1.msra.mxu0 0.0
    %1140 = vmatprep.subr.mxu0 0.0
    %1141 = vmatpush1.msra.mxu0 0.0
    %1142 = vmatprep.subr.mxu0 0.0
    %1143 = vmatpush1.msra.mxu0 0.0
    %1144 = vmatprep.subr.mxu0 0.0
    %1145 = vmatpush1.msra.mxu0 0.0
    %1146 = vmatprep.subr.mxu0 0.0
    %1147 = vmatpush1.msra.mxu0 0.0
    %1148 = vmatprep.subr.mxu0 0.0
    %1149 = vmatpush1.msra.mxu0 0.0
    %1150 = vmatprep.subr.mxu0 0.0
    %1151 = vmatpush1.msra.mxu0 0.0
    %1152 = vmatprep.subr.mxu0 0.0
    %1153 = vmatpush1.msra.mxu0 0.0
    %1154 = vmatprep.mubr.f32.mxu0 0.0
    %1155 = vmatmul.mubr.f32.gmra.mrb[0].mxu0 %v1088
    %v1156 = vpop.f32.mrb[0].mxu0
    %v1157 = vadd.f32 %v1084, %v1156
    %v1158 = vpop.f32.mrb[0].mxu0
    %1159 = vdwg.mxu0
    %1160 = vst [vmem:[#allocation8] sm:$0xff] %v1157
    // Predicated region
    $region26: #{tpu_custom_call.1} parent=1 // pred_check
      _
    $region27: #{tpu_custom_call.1} parent=1 // pred_check_branch
      %1162 = sbr.rel (0) target = $region29
    $region28: #{tpu_custom_call.1} parent=1 // pred_region
      %s1164 = ssub.s32 128, 128
      %1165 = vsyncadd [#allocation4], %s1164
      %s1167 = sshll.u32 [#allocation8], 4
      %s1168 = int_to_ptr.vmem [resolvable:$true] %s1167
      %1170 = dma.vmem_to_hbm [thread:$0]  %s1168, 128, %s3, [#allocation4]
    $region29: #{tpu_custom_call.1} parent=1 // pred_fallthru
      _
    // Predicated region
    $region30: #{tpu_custom_call.1} parent=1 // pred_check
      _
    $region31: #{tpu_custom_call.1} parent=1 // pred_check_branch
      %1172 = sbr.rel (0) target = $region33
    $region32: #{tpu_custom_call.1} parent=1 // pred_region
      %1173 = dma.done [#allocation4], 128
    $region33: #{tpu_custom_call.1} parent=1 // pred_fallthru
      _
    %1174 = vsyncpa [#allocation3], 1
    %1175 = vsyncpa [#allocation6], 1
    %1176 = vsyncpa [#allocation4], 1

</llo_original>
